<compile_context>
chip_gen: v6e
topology: v6e:2x2x1
jax: 0.10.0
libtpu: 0.0.40
codegen_flags: <defaults>
</compile_context>

<pallas_src>
import jax
import jax.numpy as jnp
from jax.experimental import pallas as pl
from jax.experimental.pallas import tpu as pltpu


H1, H2 = 400, 300      # PyTorch layer widths
H1P, H2P = 512, 384    # padded to 128-lane multiples (zero-padded, exact math)


def critic_kernel(x_ref, u_ref, w1x_ref, w1u_ref, b1_ref,
                  w2_ref, b2_ref, w3_ref, b3_ref, o_ref):
    """One batch tile of q = l3(relu(l2(relu(l1([x, u])))))."""
    # Layer 1: concat-free split matmul  x@W1[:S] + u@W1[S:]  (bf16 MXU, f32 acc).
    x = x_ref[...].astype(jnp.bfloat16)
    u = u_ref[...].astype(jnp.bfloat16)
    h1 = jnp.dot(x, w1x_ref[...], preferred_element_type=jnp.float32)
    h1 = h1 + jnp.dot(u, w1u_ref[...], preferred_element_type=jnp.float32)
    h1 = jnp.maximum(h1 + b1_ref[...], 0.0)           # f32 bias + ReLU (VPU)

    # Layer 2: bf16 MXU matmul, f32 accumulation, f32 bias + ReLU.
    h2 = jnp.dot(h1.astype(jnp.bfloat16), w2_ref[...],
                 preferred_element_type=jnp.float32)
    h2 = jnp.maximum(h2 + b2_ref[...], 0.0)

    # Layer 3 (N=1): VPU multiply + lane reduction instead of a 1-lane MXU pass.
    # Padded lanes of w3 are zero, so the sum equals the unpadded dot product.
    q = jnp.sum(h2 * w3_ref[...], axis=-1, keepdims=True) + b3_ref[...]
    o_ref[...] = q.astype(o_ref.dtype)


def prepare_params(w1, b1, w2, b2, w3, b3, state_dim):
    """One-time prep: pad to 128-lane multiples, split W1 (removes the concat),
    and cast the big matmul weights to bf16 (accumulation stays f32)."""
    w1p = jnp.pad(w1, ((0, 0), (0, H1P - H1)))
    w1x = w1p[:state_dim].astype(jnp.bfloat16)             # [S, 512]
    w1u = w1p[state_dim:].astype(jnp.bfloat16)             # [A, 512]
    b1p = jnp.pad(b1.reshape(1, -1), ((0, 0), (0, H1P - H1)))          # [1, 512] f32
    w2p = jnp.pad(w2, ((0, H1P - H1), (0, H2P - H2))).astype(jnp.bfloat16)  # [512, 384]
    b2p = jnp.pad(b2.reshape(1, -1), ((0, 0), (0, H2P - H2)))          # [1, 384] f32
    w3r = jnp.pad(w3.reshape(1, -1), ((0, 0), (0, H2P - H2)))          # [1, 384] f32
    b3p = b3.reshape(1, 1)                                             # [1, 1]  f32
    return w1x, w1u, b1p, w2p, b2p, w3r, b3p


def critic_forward(x, u, prepared_params, *, batch_tile=256):
    """x: [B, state_dim], u: [B, action_dim] -> q: [B, 1] (float32)."""
    w1x, w1u, b1, w2, b2, w3, b3 = prepared_params
    B, S = x.shape
    A = u.shape[1]
    bt = B if B <= batch_tile else batch_tile
    grid = (pl.cdiv(B, bt),)

    def resident(shape):
        # Same block index every grid step -> stays in VMEM, no re-DMA.
        return pl.BlockSpec(shape, lambda i: (0, 0))

    return pl.pallas_call(
        critic_kernel,
        out_shape=jax.ShapeDtypeStruct((B, 1), jnp.float32),
        grid=grid,
        in_specs=[
            pl.BlockSpec((bt, S), lambda i: (i, 0)),   # x batch tile
            pl.BlockSpec((bt, A), lambda i: (i, 0)),   # u batch tile
            resident((S, H1P)),                        # W1[:S]  (bf16)
            resident((A, H1P)),                        # W1[S:]  (bf16)
            resident((1, H1P)),                        # b1      (f32)
            resident((H1P, H2P)),                      # W2      (bf16)
            resident((1, H2P)),                        # b2      (f32)
            resident((1, H2P)),                        # W3 row  (f32)
            resident((1, 1)),                          # b3      (f32)
        ],
        out_specs=pl.BlockSpec((bt, 1), lambda i: (i, 0)),
        compiler_params=pltpu.CompilerParams(
            dimension_semantics=("parallel",)),
    )(x, u, w1x, w1u, b1, w2, b2, w3, b3)


def init_params(key, state_dim, action_dim):
    """Deterministic synthetic init (PyTorch-like uniform fan-in bounds)."""
    d_in = state_dim + action_dim
    dims = [(d_in, H1), (H1, H2), (H2, 1)]
    params = []
    for fin, fout in dims:
        kw, kb, key = jax.random.split(key, 3)
        bound = 1.0 / jnp.sqrt(fin)
        w = jax.random.uniform(kw, (fin, fout), jnp.float32, -bound, bound)
        b = jax.random.uniform(kb, (fout,), jnp.float32, -bound, bound)
        params += [w, b]
    return tuple(params)


if __name__ == "__main__":
    key = jax.random.PRNGKey(0)
    k_p, k_data = jax.random.split(key)

    state_dim, action_dim = 16, 8
    w1, b1, w2, b2, w3, b3 = init_params(k_p, state_dim, action_dim)
    prepared = prepare_params(w1, b1, w2, b2, w3, b3, state_dim)

    def reference(x, u):
        xu = jnp.concatenate([x, u], axis=1)
        h1 = jnp.maximum(xu @ w1 + b1, 0.0)
        h2 = jnp.maximum(h1 @ w2 + b2, 0.0)
        return h2 @ w3 + b3

    ok = True
    # batch=2: the module's nominal small case (single tile, grid=1).
    # batch=300: exercises grid>1 with a ragged final batch tile.
    for batch in (2, 300):
        kx, ku = jax.random.split(jax.random.fold_in(k_data, batch))
        x = jax.random.normal(kx, (batch, state_dim), jnp.float32)
        u = jax.random.normal(ku, (batch, action_dim), jnp.float32)

        q = critic_forward(x, u, prepared)
        jax.block_until_ready(q)

        q_ref = reference(x, u)
        ok &= (q.shape == (batch, 1))
        # bf16 MXU inputs with f32 accumulation -> loosened tolerance.
        ok &= bool(jnp.allclose(q, q_ref, atol=3e-2, rtol=3e-2))

    assert ok
    print("KERNEL_OK")
</pallas_src>

<mosaic_0001>
module attributes {stable_mosaic.version = 11 : i64} {
  func.func @critic_kernel(%arg0: i32, %arg1: memref<2x16xf32, #tpu.memory_space<vmem>>, %arg2: memref<2x8xf32, #tpu.memory_space<vmem>>, %arg3: memref<16x512xbf16, #tpu.memory_space<vmem>>, %arg4: memref<8x512xbf16, #tpu.memory_space<vmem>>, %arg5: memref<1x512xf32, #tpu.memory_space<vmem>>, %arg6: memref<512x384xbf16, #tpu.memory_space<vmem>>, %arg7: memref<1x384xf32, #tpu.memory_space<vmem>>, %arg8: memref<1x384xf32, #tpu.memory_space<vmem>>, %arg9: memref<1x1xf32, #tpu.memory_space<vmem>>, %arg10: memref<2x1xf32, #tpu.memory_space<vmem>>) attributes {dimension_semantics = [#tpu.dimension_semantics<parallel>], iteration_bounds = array<i64: 1>, scalar_prefetch = 0 : i64, scratch_operands = 0 : i64, tpu.core_type = #tpu.core_type<tc>, window_params = [{transform_indices = @transform_0, window_bounds = array<i64: 2, 16>}, {transform_indices = @transform_1, window_bounds = array<i64: 2, 8>}, {pipeline_mode = #tpu.pipeline_mode<synchronous>, transform_indices = @transform_2, window_bounds = array<i64: 16, 512>}, {pipeline_mode = #tpu.pipeline_mode<synchronous>, transform_indices = @transform_3, window_bounds = array<i64: 8, 512>}, {pipeline_mode = #tpu.pipeline_mode<synchronous>, transform_indices = @transform_4, window_bounds = array<i64: 1, 512>}, {pipeline_mode = #tpu.pipeline_mode<synchronous>, transform_indices = @transform_5, window_bounds = array<i64: 512, 384>}, {pipeline_mode = #tpu.pipeline_mode<synchronous>, transform_indices = @transform_6, window_bounds = array<i64: 1, 384>}, {pipeline_mode = #tpu.pipeline_mode<synchronous>, transform_indices = @transform_7, window_bounds = array<i64: 1, 384>}, {pipeline_mode = #tpu.pipeline_mode<synchronous>, transform_indices = @transform_8, window_bounds = array<i64: 1, 1>}, {transform_indices = @transform_9, window_bounds = array<i64: 2, 1>}]} {
    %c0 = arith.constant 0 : index
    %c0_0 = arith.constant 0 : index
    %0 = vector.load %arg1[%c0, %c0_0] : memref<2x16xf32, #tpu.memory_space<vmem>>, vector<2x16xf32>
    %1 = arith.truncf %0 : vector<2x16xf32> to vector<2x16xbf16>
    %c0_1 = arith.constant 0 : index
    %c0_2 = arith.constant 0 : index
    %2 = vector.load %arg2[%c0_1, %c0_2] : memref<2x8xf32, #tpu.memory_space<vmem>>, vector<2x8xf32>
    %3 = arith.truncf %2 : vector<2x8xf32> to vector<2x8xbf16>
    %c0_3 = arith.constant 0 : index
    %c0_4 = arith.constant 0 : index
    %4 = vector.load %arg3[%c0_3, %c0_4] : memref<16x512xbf16, #tpu.memory_space<vmem>>, vector<16x512xbf16>
    %cst = arith.constant dense<0.000000e+00> : vector<2x512xf32>
    %5 = tpu.matmul %1, %4, %cst {dimension_numbers = #tpu.dot_dimension_numbers<[1], [0], [0], [1], [0, 0, 1, 1], [], []>} : vector<2x16xbf16>, vector<16x512xbf16>, vector<2x512xf32> -> vector<2x512xf32>
    %c0_5 = arith.constant 0 : index
    %c0_6 = arith.constant 0 : index
    %6 = vector.load %arg4[%c0_5, %c0_6] : memref<8x512xbf16, #tpu.memory_space<vmem>>, vector<8x512xbf16>
    %cst_7 = arith.constant dense<0.000000e+00> : vector<2x512xf32>
    %7 = tpu.matmul %3, %6, %cst_7 {dimension_numbers = #tpu.dot_dimension_numbers<[1], [0], [0], [1], [0, 0, 1, 1], [], []>} : vector<2x8xbf16>, vector<8x512xbf16>, vector<2x512xf32> -> vector<2x512xf32>
    %8 = arith.addf %5, %7 : vector<2x512xf32>
    %c0_8 = arith.constant 0 : index
    %c0_9 = arith.constant 0 : index
    %9 = vector.load %arg5[%c0_8, %c0_9] : memref<1x512xf32, #tpu.memory_space<vmem>>, vector<1x512xf32>
    %10 = vector.broadcast %9 : vector<1x512xf32> to vector<2x512xf32>
    %11 = arith.addf %8, %10 : vector<2x512xf32>
    %cst_10 = arith.constant 0.000000e+00 : f32
    %12 = vector.broadcast %cst_10 : f32 to vector<2x512xf32>
    %13 = arith.maximumf %11, %12 : vector<2x512xf32>
    %14 = arith.truncf %13 : vector<2x512xf32> to vector<2x512xbf16>
    %c0_11 = arith.constant 0 : index
    %c0_12 = arith.constant 0 : index
    %15 = vector.load %arg6[%c0_11, %c0_12] : memref<512x384xbf16, #tpu.memory_space<vmem>>, vector<512x384xbf16>
    %cst_13 = arith.constant dense<0.000000e+00> : vector<2x384xf32>
    %16 = tpu.matmul %14, %15, %cst_13 {dimension_numbers = #tpu.dot_dimension_numbers<[1], [0], [0], [1], [0, 0, 1, 1], [], []>} : vector<2x512xbf16>, vector<512x384xbf16>, vector<2x384xf32> -> vector<2x384xf32>
    %c0_14 = arith.constant 0 : index
    %c0_15 = arith.constant 0 : index
    %17 = vector.load %arg7[%c0_14, %c0_15] : memref<1x384xf32, #tpu.memory_space<vmem>>, vector<1x384xf32>
    %18 = vector.broadcast %17 : vector<1x384xf32> to vector<2x384xf32>
    %19 = arith.addf %16, %18 : vector<2x384xf32>
    %cst_16 = arith.constant 0.000000e+00 : f32
    %20 = vector.broadcast %cst_16 : f32 to vector<2x384xf32>
    %21 = arith.maximumf %19, %20 : vector<2x384xf32>
    %c0_17 = arith.constant 0 : index
    %c0_18 = arith.constant 0 : index
    %22 = vector.load %arg8[%c0_17, %c0_18] : memref<1x384xf32, #tpu.memory_space<vmem>>, vector<1x384xf32>
    %23 = vector.broadcast %22 : vector<1x384xf32> to vector<2x384xf32>
    %24 = arith.mulf %21, %23 : vector<2x384xf32>
    %cst_19 = arith.constant dense<0.000000e+00> : vector<2xf32>
    %25 = vector.multi_reduction <add>, %24, %cst_19 [1] : vector<2x384xf32> to vector<2xf32>
    %26 = vector.shape_cast %25 : vector<2xf32> to vector<2x1xf32>
    %c0_20 = arith.constant 0 : index
    %c0_21 = arith.constant 0 : index
    %27 = vector.load %arg9[%c0_20, %c0_21] : memref<1x1xf32, #tpu.memory_space<vmem>>, vector<1x1xf32>
    %28 = vector.broadcast %27 : vector<1x1xf32> to vector<2x1xf32>
    %29 = arith.addf %26, %28 : vector<2x1xf32>
    %c0_22 = arith.constant 0 : index
    %c0_23 = arith.constant 0 : index
    %30 = vector.load %arg10[%c0_22, %c0_23] : memref<2x1xf32, #tpu.memory_space<vmem>>, vector<2x1xf32>
    tpu.vector_store %arg10[%c0_22, %c0_23], %29 {strides = array<i32>} : memref<2x1xf32, #tpu.memory_space<vmem>>, vector<2x1xf32>,
    return
  }
  func.func @transform_0(%arg0: i32) -> (i32, i32) {
    %c0_i32 = arith.constant 0 : i32
    %c0_i32_0 = arith.constant 0 : i32
    return %arg0, %c0_i32 : i32, i32
  }
  func.func @transform_1(%arg0: i32) -> (i32, i32) {
    %c0_i32 = arith.constant 0 : i32
    %c0_i32_0 = arith.constant 0 : i32
    return %arg0, %c0_i32 : i32, i32
  }
  func.func @transform_2(%arg0: i32) -> (i32, i32) {
    %c0_i32 = arith.constant 0 : i32
    %c0_i32_0 = arith.constant 0 : i32
    %c0_i32_1 = arith.constant 0 : i32
    return %c0_i32, %c0_i32_0 : i32, i32
  }
  func.func @transform_3(%arg0: i32) -> (i32, i32) {
    %c0_i32 = arith.constant 0 : i32
    %c0_i32_0 = arith.constant 0 : i32
    %c0_i32_1 = arith.constant 0 : i32
    return %c0_i32, %c0_i32_0 : i32, i32
  }
  func.func @transform_4(%arg0: i32) -> (i32, i32) {
    %c0_i32 = arith.constant 0 : i32
    %c0_i32_0 = arith.constant 0 : i32
    %c0_i32_1 = arith.constant 0 : i32
    return %c0_i32, %c0_i32_0 : i32, i32
  }
  func.func @transform_5(%arg0: i32) -> (i32, i32) {
    %c0_i32 = arith.constant 0 : i32
    %c0_i32_0 = arith.constant 0 : i32
    %c0_i32_1 = arith.constant 0 : i32
    return %c0_i32, %c0_i32_0 : i32, i32
  }
  func.func @transform_6(%arg0: i32) -> (i32, i32) {
    %c0_i32 = arith.constant 0 : i32
    %c0_i32_0 = arith.constant 0 : i32
    %c0_i32_1 = arith.constant 0 : i32
    return %c0_i32, %c0_i32_0 : i32, i32
  }
  func.func @transform_7(%arg0: i32) -> (i32, i32) {
    %c0_i32 = arith.constant 0 : i32
    %c0_i32_0 = arith.constant 0 : i32
    %c0_i32_1 = arith.constant 0 : i32
    return %c0_i32, %c0_i32_0 : i32, i32
  }
  func.func @transform_8(%arg0: i32) -> (i32, i32) {
    %c0_i32 = arith.constant 0 : i32
    %c0_i32_0 = arith.constant 0 : i32
    %c0_i32_1 = arith.constant 0 : i32
    return %c0_i32, %c0_i32_0 : i32, i32
  }
  func.func @transform_9(%arg0: i32) -> (i32, i32) {
    %c0_i32 = arith.constant 0 : i32
    %c0_i32_0 = arith.constant 0 : i32
    return %arg0, %c0_i32 : i32, i32
  }
}

</mosaic_0001>

<llo_original>
// kernel: tpu_custom_call.1
$region0: #{tpu_custom_call.1}
  #allocation0 [shape = 'u32[]', space=smem, size = 0x4, offset = 0x4, fixed_abs, tag = 'smem constant byte address 0x4 - core index']
  #allocation1 [shape = 'u32[144,128]{1,0:T(1,128)}', space=vmem, size = 0x12000, scoped, tag = 'internal scratch']
  #allocation2 [shape = 'f32[1,1]{1,0:T(1,128)S(1)}', space=vmem, size = 0x200, scoped, tag = 'scoped memory for tpu_custom_call.1']
  %s0 = inlined_call_operand.hbm [shape: f32[2,16], index: 0, kind: input, shape index: {}]
  %s1 = inlined_call_operand.hbm [shape: f32[2,8], index: 1, kind: input, shape index: {}]
  %s2 = inlined_call_operand.hbm [shape: bf16[16,512], index: 2, kind: input, shape index: {}]
  %s3 = inlined_call_operand.hbm [shape: bf16[8,512], index: 3, kind: input, shape index: {}]
  %s4 = inlined_call_operand.vmem [shape: f32[1,512], index: 4, kind: input, shape index: {}]
  %s5 = inlined_call_operand.hbm [shape: bf16[512,384], index: 5, kind: input, shape index: {}]
  %s6 = inlined_call_operand.vmem [shape: f32[1,384], index: 6, kind: input, shape index: {}]
  %s7 = inlined_call_operand.vmem [shape: f32[1,384], index: 7, kind: input, shape index: {}]
  %s8 = inlined_call_operand.<no memory space> [shape: f32[1,1], index: 8, kind: input, shape index: {}]
  %s9 = inlined_call_operand.vmem [shape: f32[2,1], index: 9, kind: output, shape index: {}]
  %s10 = sld [smem:[#allocation0]]
  $region66: #{tpu_custom_call.1} parent=0
    _
  %s12 = ssub.s32 1, %s10
  %s13 = scalar_select 0, %s12, %s10
  %v14 = vstv %s8
  %15 = vst [vmem:[#allocation2] sm:$0x1] %v14
  $region1: #{tpu_custom_call.1} parent=0
    #allocation3 [shape = 'u8[1024]{0}', space=vmem, size = 0x400, scoped, tag = 'input window, operand 0, single buffered']
    #allocation4 [shape = 's32[1]{0}', space=sflag, size = 0x4, scoped, tag = 'scoped memory for tpu_custom_call.1']
    #allocation5 [shape = 'u8[1024]{0}', space=vmem, size = 0x400, scoped, tag = 'input window, operand 1, single buffered']
    #allocation6 [shape = 's32[1]{0}', space=sflag, size = 0x4, scoped, tag = 'scoped memory for tpu_custom_call.1']
    #allocation7 [shape = 'u8[16384]{0}', space=vmem, size = 0x4000, scoped, tag = 'input window, operand 2, single buffered']
    #allocation8 [shape = 'u8[8192]{0}', space=vmem, size = 0x2000, scoped, tag = 'input window, operand 3, single buffered']
    #allocation9 [shape = 's32[1]{0}', space=sflag, size = 0x4, scoped, tag = 'scoped memory for tpu_custom_call.1']
    #allocation10 [shape = 'u8[393216]{0}', space=vmem, size = 0x60000, scoped, tag = 'input window, operand 5, single buffered']
    %16 = vsyncpa [#allocation4], 0
    %17 = vsyncpa [#allocation6], 0
    %18 = vsyncpa [#allocation9], 0
    // Predicated region
    $region2: #{tpu_custom_call.1} parent=1 // pred_check
      _
    $region3: #{tpu_custom_call.1} parent=1 // pred_check_branch
      %20 = sbr.rel (0) target = $region5
    $region4: #{tpu_custom_call.1} parent=1 // pred_region
      %s22 = ssub.s32 32, 32
      %23 = vsyncadd [#allocation4], %s22
      %s25 = sshll.u32 [#allocation3], 4
      %s26 = int_to_ptr.vmem [resolvable:$true] %s25
      %28 = dma.hbm_to_vmem [thread:$0]  %s0, 32, %s26, [#allocation4]
    $region5: #{tpu_custom_call.1} parent=1 // pred_fallthru
      _
    // Predicated region
    $region6: #{tpu_custom_call.1} parent=1 // pred_check
      _
    $region7: #{tpu_custom_call.1} parent=1 // pred_check_branch
      %30 = sbr.rel (0) target = $region9
    $region8: #{tpu_custom_call.1} parent=1 // pred_region
      %s32 = ssub.s32 32, 32
      %33 = vsyncadd [#allocation6], %s32
      %s35 = sshll.u32 [#allocation5], 4
      %s36 = int_to_ptr.vmem [resolvable:$true] %s35
      %38 = dma.hbm_to_vmem [thread:$0]  %s1, 32, %s36, [#allocation6]
    $region9: #{tpu_custom_call.1} parent=1 // pred_fallthru
      _
    // Predicated region
    $region10: #{tpu_custom_call.1} parent=1 // pred_check
      _
    $region11: #{tpu_custom_call.1} parent=1 // pred_check_branch
      %40 = sbr.rel (0) target = $region13
    $region12: #{tpu_custom_call.1} parent=1 // pred_region
      %s42 = ssub.s32 512, 512
      %43 = vsyncadd [#allocation6], %s42
      %s44 = sshll.u32 [#allocation7], 4
      %s45 = int_to_ptr.vmem [resolvable:$true] %s44
      %50 = dma.hbm_to_vmem [thread:$0]  %s2, 512, %s45, [#allocation6], 256, 256, 16
    $region13: #{tpu_custom_call.1} parent=1 // pred_fallthru
      _
    // Predicated region
    $region14: #{tpu_custom_call.1} parent=1 // pred_check
      _
    $region15: #{tpu_custom_call.1} parent=1 // pred_check_branch
      %52 = sbr.rel (0) target = $region17
    $region16: #{tpu_custom_call.1} parent=1 // pred_region
      %s54 = ssub.s32 256, 256
      %55 = vsyncadd [#allocation9], %s54
      %s57 = sshll.u32 [#allocation8], 4
      %s58 = int_to_ptr.vmem [resolvable:$true] %s57
      %60 = dma.hbm_to_vmem [thread:$0]  %s3, 256, %s58, [#allocation9]
    $region17: #{tpu_custom_call.1} parent=1 // pred_fallthru
      _
    // Predicated region
    $region18: #{tpu_custom_call.1} parent=1 // pred_check
      _
    $region19: #{tpu_custom_call.1} parent=1 // pred_check_branch
      %62 = sbr.rel (0) target = $region21
    $region20: #{tpu_custom_call.1} parent=1 // pred_region
      _
    $region21: #{tpu_custom_call.1} parent=1 // pred_fallthru
      _
    // Predicated region
    $region22: #{tpu_custom_call.1} parent=1 // pred_check
      _
    $region23: #{tpu_custom_call.1} parent=1 // pred_check_branch
      %64 = sbr.rel (0) target = $region25
    $region24: #{tpu_custom_call.1} parent=1 // pred_region
      %s66 = ssub.s32 12288, 12288
      %67 = vsyncadd [#allocation9], %s66
      %s68 = sshll.u32 [#allocation10], 4
      %s69 = int_to_ptr.vmem [resolvable:$true] %s68
      %74 = dma.hbm_to_vmem [thread:$0]  %s5, 12288, %s69, [#allocation9], 192, 192, 12
    $region25: #{tpu_custom_call.1} parent=1 // pred_fallthru
      _
    // Predicated region
    $region26: #{tpu_custom_call.1} parent=1 // pred_check
      _
    $region27: #{tpu_custom_call.1} parent=1 // pred_check_branch
      %76 = sbr.rel (0) target = $region29
    $region28: #{tpu_custom_call.1} parent=1 // pred_region
      _
    $region29: #{tpu_custom_call.1} parent=1 // pred_fallthru
      _
    // Predicated region
    $region30: #{tpu_custom_call.1} parent=1 // pred_check
      _
    $region31: #{tpu_custom_call.1} parent=1 // pred_check_branch
      %78 = sbr.rel (0) target = $region33
    $region32: #{tpu_custom_call.1} parent=1 // pred_region
      _
    $region33: #{tpu_custom_call.1} parent=1 // pred_fallthru
      _
    // Predicated region
    $region34: #{tpu_custom_call.1} parent=1 // pred_check
      _
    $region35: #{tpu_custom_call.1} parent=1 // pred_check_branch
      %80 = sbr.rel (0) target = $region37
    $region36: #{tpu_custom_call.1} parent=1 // pred_region
      _
    $region37: #{tpu_custom_call.1} parent=1 // pred_fallthru
      _
    // Predicated region
    $region38: #{tpu_custom_call.1} parent=1 // pred_check
      _
    $region39: #{tpu_custom_call.1} parent=1 // pred_check_branch
      %82 = sbr.rel (0) target = $region41
    $region40: #{tpu_custom_call.1} parent=1 // pred_region
      %83 = dma.done [#allocation4], 32
    $region41: #{tpu_custom_call.1} parent=1 // pred_fallthru
      _
    // Predicated region
    $region42: #{tpu_custom_call.1} parent=1 // pred_check
      _
    $region43: #{tpu_custom_call.1} parent=1 // pred_check_branch
      %85 = sbr.rel (0) target = $region45
    $region44: #{tpu_custom_call.1} parent=1 // pred_region
      %86 = dma.done [#allocation6], 32
    $region45: #{tpu_custom_call.1} parent=1 // pred_fallthru
      _
    // Predicated region
    $region46: #{tpu_custom_call.1} parent=1 // pred_check
      _
    $region47: #{tpu_custom_call.1} parent=1 // pred_check_branch
      %88 = sbr.rel (0) target = $region49
    $region48: #{tpu_custom_call.1} parent=1 // pred_region
      %89 = dma.done [#allocation6], 512
    $region49: #{tpu_custom_call.1} parent=1 // pred_fallthru
      _
    // Predicated region
    $region50: #{tpu_custom_call.1} parent=1 // pred_check
      _
    $region51: #{tpu_custom_call.1} parent=1 // pred_check_branch
      %91 = sbr.rel (0) target = $region53
    $region52: #{tpu_custom_call.1} parent=1 // pred_region
      %92 = dma.done [#allocation9], 256
    $region53: #{tpu_custom_call.1} parent=1 // pred_fallthru
      _
    // Predicated region
    $region54: #{tpu_custom_call.1} parent=1 // pred_check
      _
    $region55: #{tpu_custom_call.1} parent=1 // pred_check_branch
      %94 = sbr.rel (0) target = $region57
    $region56: #{tpu_custom_call.1} parent=1 // pred_region
      %95 = dma.done [#allocation9], 12288
    $region57: #{tpu_custom_call.1} parent=1 // pred_fallthru
      _
    %v97 = vld [vmem:[#allocation3] sm:$0x3]
    %v98 = vpack.c.bf16 %v97, %v97
    %v99 = vld [vmem:[#allocation5] sm:$0x3]
    %v100 = vpack.c.bf16 %v99, %v99
    %v101 = vld [vmem:[#allocation7] sm:$0xff]
    %v102 = vld [vmem:[#allocation7 + $0x8] sm:$0xff]
    %v103 = vld [vmem:[#allocation7 + $0x10] sm:$0xff]
    %v104 = vld [vmem:[#allocation7 + $0x18] sm:$0xff]
    %v105 = vld [vmem:[#allocation8] sm:$0xff]
    %v106 = vld [vmem:[#allocation8 + $0x8] sm:$0xff]
    %v109 = vunpack.c.l.b16 %v105
    %v110 = vunpack.c.h.b16 %v105
    %v111 = vunpack.c.l.b16 %v106
    %v112 = vunpack.c.h.b16 %v106
    %v113 = vpack.c.b16 %v109, %v109
    %v114 = vpack.c.b16 %v110, %v110
    %v115 = vpack.c.b16 %v111, %v111
    %v116 = vpack.c.b16 %v112, %v112
    %vm117 = vcmask 64512
    %v119 = vsel %vm117, %v100, 0
    %vm121 = vcmask 1043456
    %v123 = vsel %vm121, %v113, 0
    %v126 = vsel %vm121, %v114, 0
    %v129 = vsel %vm121, %v115, 0
    %v132 = vsel %vm121, %v116, 0
    %134 = vmatprep.subr.bf16.mxu0 0
    %135 = vmatpush1.bf16.msra.mxu0 0
    %136 = vmatprep.subr.bf16.mxu0 0
    %137 = vmatpush1.bf16.msra.mxu0 0
    %138 = vmatprep.subr.bf16.mxu0 0
    %139 = vmatpush1.bf16.msra.mxu0 0
    %140 = vmatprep.subr.bf16.mxu0 0
    %141 = vmatpush1.bf16.msra.mxu0 0
    %142 = vmatprep.subr.bf16.mxu0 0
    %143 = vmatpush1.bf16.msra.mxu0 0
    %144 = vmatprep.subr.bf16.mxu0 0
    %145 = vmatpush1.bf16.msra.mxu0 0
    %146 = vmatprep.subr.bf16.mxu0 0
    %147 = vmatpush1.bf16.msra.mxu0 0
    %148 = vmatprep.subr.bf16.mxu0 %v126
    %149 = vmatpush1.bf16.msra.mxu0 %v123
    %150 = vmatprep.subr.bf16.mxu0 0
    %151 = vmatpush2.bf16.msra.mxu0 0
    %152 = vmatprep.subr.bf16.mxu0 0
    %153 = vmatpush2.bf16.msra.mxu0 0
    %154 = vmatprep.subr.bf16.mxu0 0
    %155 = vmatpush2.bf16.msra.mxu0 0
    %156 = vmatprep.subr.bf16.mxu0 0
    %157 = vmatpush2.bf16.msra.mxu0 0
    %158 = vmatprep.subr.bf16.mxu0 0
    %159 = vmatpush2.bf16.msra.mxu0 0
    %160 = vmatprep.subr.bf16.mxu0 0
    %161 = vmatpush2.bf16.msra.mxu0 0
    %162 = vmatprep.subr.bf16.mxu0 0
    %163 = vmatpush2.bf16.msra.mxu0 0
    %164 = vmatprep.subr.bf16.mxu0 0
    %165 = vmatpush2.bf16.msra.mxu0 0
    %166 = vmatprep.mubr.bf16.mxu0 0
    %167 = vmatmul.mubr.bf16.gmra.mxu0 %v119
    %v168 = vpop.f32.mrf.mxu0
    %v169 = vadd.f32 0.0, %v168
    %v170 = vpop.f32.mrf.mxu0
    %v171 = vadd.f32 0.0, %v170
    %v172 = vpop.f32.mrf.mxu0
    %v173 = vpop.f32.mrf.mxu0
    %174 = vdwg.mxu0
    %175 = vmatprep.subr.bf16.mxu0 0
    %176 = vmatpush1.bf16.msra.mxu0 0
    %177 = vmatprep.subr.bf16.mxu0 0
    %178 = vmatpush1.bf16.msra.mxu0 0
    %179 = vmatprep.subr.bf16.mxu0 0
    %180 = vmatpush1.bf16.msra.mxu0 0
    %181 = vmatprep.subr.bf16.mxu0 0
    %182 = vmatpush1.bf16.msra.mxu0 0
    %183 = vmatprep.subr.bf16.mxu0 0
    %184 = vmatpush1.bf16.msra.mxu0 0
    %185 = vmatprep.subr.bf16.mxu0 0
    %186 = vmatpush1.bf16.msra.mxu0 0
    %187 = vmatprep.subr.bf16.mxu0 0
    %188 = vmatpush1.bf16.msra.mxu0 0
    %189 = vmatprep.subr.bf16.mxu0 %v132
    %190 = vmatpush1.bf16.msra.mxu0 %v129
    %191 = vmatprep.subr.bf16.mxu0 0
    %192 = vmatpush2.bf16.msra.mxu0 0
    %193 = vmatprep.subr.bf16.mxu0 0
    %194 = vmatpush2.bf16.msra.mxu0 0
    %195 = vmatprep.subr.bf16.mxu0 0
    %196 = vmatpush2.bf16.msra.mxu0 0
    %197 = vmatprep.subr.bf16.mxu0 0
    %198 = vmatpush2.bf16.msra.mxu0 0
    %199 = vmatprep.subr.bf16.mxu0 0
    %200 = vmatpush2.bf16.msra.mxu0 0
    %201 = vmatprep.subr.bf16.mxu0 0
    %202 = vmatpush2.bf16.msra.mxu0 0
    %203 = vmatprep.subr.bf16.mxu0 0
    %204 = vmatpush2.bf16.msra.mxu0 0
    %205 = vmatprep.subr.bf16.mxu0 0
    %206 = vmatpush2.bf16.msra.mxu0 0
    %207 = vmatprep.mubr.bf16.mxu0 0
    %208 = vmatmul.mubr.bf16.gmra.mxu0 %v119
    %v209 = vpop.f32.mrf.mxu0
    %v210 = vadd.f32 0.0, %v209
    %v211 = vpop.f32.mrf.mxu0
    %v212 = vadd.f32 0.0, %v211
    %v213 = vpop.f32.mrf.mxu0
    %v214 = vpop.f32.mrf.mxu0
    %215 = vdwg.mxu0
    %v220 = vunpack.c.l.b16 %v101
    %v221 = vunpack.c.h.b16 %v101
    %v222 = vunpack.c.l.b16 %v102
    %v223 = vunpack.c.h.b16 %v102
    %v224 = vunpack.c.l.b16 %v103
    %v225 = vunpack.c.h.b16 %v103
    %v226 = vunpack.c.l.b16 %v104
    %v227 = vunpack.c.h.b16 %v104
    %v228 = vpack.c.b16 %v224, %v220
    %v229 = vpack.c.b16 %v225, %v221
    %v230 = vpack.c.b16 %v226, %v222
    %v231 = vpack.c.b16 %v227, %v223
    %vm236 = vcmask 130048
    %v238 = vsel %vm236, %v98, 0
    %240 = vmatprep.subr.bf16.mxu0 0
    %241 = vmatpush1.bf16.msra.mxu0 0
    %242 = vmatprep.subr.bf16.mxu0 0
    %243 = vmatpush1.bf16.msra.mxu0 0
    %244 = vmatprep.subr.bf16.mxu0 0
    %245 = vmatpush1.bf16.msra.mxu0 0
    %246 = vmatprep.subr.bf16.mxu0 0
    %247 = vmatpush1.bf16.msra.mxu0 0
    %248 = vmatprep.subr.bf16.mxu0 0
    %249 = vmatpush1.bf16.msra.mxu0 0
    %250 = vmatprep.subr.bf16.mxu0 0
    %251 = vmatpush1.bf16.msra.mxu0 0
    %252 = vmatprep.subr.bf16.mxu0 0
    %253 = vmatpush1.bf16.msra.mxu0 0
    %254 = vmatprep.subr.bf16.mxu0 %v229
    %255 = vmatpush1.bf16.msra.mxu0 %v228
    %256 = vmatprep.subr.bf16.mxu0 0
    %257 = vmatpush2.bf16.msra.mxu0 0
    %258 = vmatprep.subr.bf16.mxu0 0
    %259 = vmatpush2.bf16.msra.mxu0 0
    %260 = vmatprep.subr.bf16.mxu0 0
    %261 = vmatpush2.bf16.msra.mxu0 0
    %262 = vmatprep.subr.bf16.mxu0 0
    %263 = vmatpush2.bf16.msra.mxu0 0
    %264 = vmatprep.subr.bf16.mxu0 0
    %265 = vmatpush2.bf16.msra.mxu0 0
    %266 = vmatprep.subr.bf16.mxu0 0
    %267 = vmatpush2.bf16.msra.mxu0 0
    %268 = vmatprep.subr.bf16.mxu0 0
    %269 = vmatpush2.bf16.msra.mxu0 0
    %270 = vmatprep.subr.bf16.mxu0 0
    %271 = vmatpush2.bf16.msra.mxu0 0
    %272 = vmatprep.mubr.bf16.mxu0 0
    %273 = vmatmul.mubr.bf16.gmra.mxu0 %v238
    %v274 = vpop.f32.mrf.mxu0
    %v275 = vadd.f32 %v169, %v274
    %v276 = vpop.f32.mrf.mxu0
    %v277 = vadd.f32 %v171, %v276
    %v278 = vpop.f32.mrf.mxu0
    %v279 = vpop.f32.mrf.mxu0
    %280 = vdwg.mxu0
    %281 = vmatprep.subr.bf16.mxu0 0
    %282 = vmatpush1.bf16.msra.mxu0 0
    %283 = vmatprep.subr.bf16.mxu0 0
    %284 = vmatpush1.bf16.msra.mxu0 0
    %285 = vmatprep.subr.bf16.mxu0 0
    %286 = vmatpush1.bf16.msra.mxu0 0
    %287 = vmatprep.subr.bf16.mxu0 0
    %288 = vmatpush1.bf16.msra.mxu0 0
    %289 = vmatprep.subr.bf16.mxu0 0
    %290 = vmatpush1.bf16.msra.mxu0 0
    %291 = vmatprep.subr.bf16.mxu0 0
    %292 = vmatpush1.bf16.msra.mxu0 0
    %293 = vmatprep.subr.bf16.mxu0 0
    %294 = vmatpush1.bf16.msra.mxu0 0
    %295 = vmatprep.subr.bf16.mxu0 %v231
    %296 = vmatpush1.bf16.msra.mxu0 %v230
    %297 = vmatprep.subr.bf16.mxu0 0
    %298 = vmatpush2.bf16.msra.mxu0 0
    %299 = vmatprep.subr.bf16.mxu0 0
    %300 = vmatpush2.bf16.msra.mxu0 0
    %301 = vmatprep.subr.bf16.mxu0 0
    %302 = vmatpush2.bf16.msra.mxu0 0
    %303 = vmatprep.subr.bf16.mxu0 0
    %304 = vmatpush2.bf16.msra.mxu0 0
    %305 = vmatprep.subr.bf16.mxu0 0
    %306 = vmatpush2.bf16.msra.mxu0 0
    %307 = vmatprep.subr.bf16.mxu0 0
    %308 = vmatpush2.bf16.msra.mxu0 0
    %309 = vmatprep.subr.bf16.mxu0 0
    %310 = vmatpush2.bf16.msra.mxu0 0
    %311 = vmatprep.subr.bf16.mxu0 0
    %312 = vmatpush2.bf16.msra.mxu0 0
    %313 = vmatprep.mubr.bf16.mxu0 0
    %314 = vmatmul.mubr.bf16.gmra.mxu0 %v238
    %v315 = vpop.f32.mrf.mxu0
    %v316 = vadd.f32 %v210, %v315
    %v317 = vpop.f32.mrf.mxu0
    %v318 = vadd.f32 %v212, %v317
    %v319 = vpop.f32.mrf.mxu0
    %v320 = vpop.f32.mrf.mxu0
    %321 = vdwg.mxu0
    %v322 = vld [vmem:[%s4] sm:$0xf]
    %v324 = vlaneseq
    %v325 = vshrl.u32 %v324, 7
    %v326 = vsub.s32 0, %v325
    %v327 = vrot.slane %v322, %v326
    %v328 = vlaneseq
    %v329 = vshrl.u32 %v328, 7
    %v330 = vsub.s32 1, %v329
    %v331 = vrot.slane %v322, %v330
    %v332 = vlaneseq
    %v333 = vshrl.u32 %v332, 7
    %v334 = vsub.s32 2, %v333
    %v335 = vrot.slane %v322, %v334
    %v336 = vlaneseq
    %v337 = vshrl.u32 %v336, 7
    %v338 = vsub.s32 3, %v337
    %v339 = vrot.slane %v322, %v338
    %v344 = vadd.f32 %v275, %v327
    %v345 = vadd.f32 %v277, %v331
    %v346 = vadd.f32 %v316, %v335
    %v347 = vadd.f32 %v318, %v339
    %v348 = vmax.f32 %v344, 0.0
    %v349 = vmax.f32 %v345, 0.0
    %v350 = vmax.f32 %v346, 0.0
    %v351 = vmax.f32 %v347, 0.0
    %v352 = vpack.c.bf16 %v348, %v348
    %v353 = vpack.c.bf16 %v349, %v349
    %v354 = vpack.c.bf16 %v350, %v350
    %v355 = vpack.c.bf16 %v351, %v351
    %v356 = vld [vmem:[#allocation10] sm:$0xff]
    %v357 = vld [vmem:[#allocation10 + $0x8] sm:$0xf]
    %v358 = vld [vmem:[#allocation10 + $0xc] sm:$0xff]
    %v359 = vld [vmem:[#allocation10 + $0x14] sm:$0xf]
    %v360 = vld [vmem:[#allocation10 + $0x18] sm:$0xff]
    %v361 = vld [vmem:[#allocation10 + $0x20] sm:$0xf]
    %v362 = vld [vmem:[#allocation10 + $0x24] sm:$0xff]
    %v363 = vld [vmem:[#allocation10 + $0x2c] sm:$0xf]
    %v364 = vld [vmem:[#allocation10 + $0x30] sm:$0xff]
    %v365 = vld [vmem:[#allocation10 + $0x38] sm:$0xf]
    %v366 = vld [vmem:[#allocation10 + $0x3c] sm:$0xff]
    %v367 = vld [vmem:[#allocation10 + $0x44] sm:$0xf]
    %v368 = vld [vmem:[#allocation10 + $0x48] sm:$0xff]
    %v369 = vld [vmem:[#allocation10 + $0x50] sm:$0xf]
    %v370 = vld [vmem:[#allocation10 + $0x54] sm:$0xff]
    %v371 = vld [vmem:[#allocation10 + $0x5c] sm:$0xf]
    %v372 = vld [vmem:[#allocation10 + $0x60] sm:$0xff]
    %v373 = vld [vmem:[#allocation10 + $0x68] sm:$0xf]
    %v374 = vld [vmem:[#allocation10 + $0x6c] sm:$0xff]
    %v375 = vld [vmem:[#allocation10 + $0x74] sm:$0xf]
    %v376 = vld [vmem:[#allocation10 + $0x78] sm:$0xff]
    %v377 = vld [vmem:[#allocation10 + $0x80] sm:$0xf]
    %v378 = vld [vmem:[#allocation10 + $0x84] sm:$0xff]
    %v379 = vld [vmem:[#allocation10 + $0x8c] sm:$0xf]
    %v380 = vld [vmem:[#allocation10 + $0x90] sm:$0xff]
    %v381 = vld [vmem:[#allocation10 + $0x98] sm:$0xf]
    %v382 = vld [vmem:[#allocation10 + $0x9c] sm:$0xff]
    %v383 = vld [vmem:[#allocation10 + $0xa4] sm:$0xf]
    %v384 = vld [vmem:[#allocation10 + $0xa8] sm:$0xff]
    %v385 = vld [vmem:[#allocation10 + $0xb0] sm:$0xf]
    %v386 = vld [vmem:[#allocation10 + $0xb4] sm:$0xff]
    %v387 = vld [vmem:[#allocation10 + $0xbc] sm:$0xf]
    %v388 = vld [vmem:[#allocation10 + $0xc0] sm:$0xff]
    %v389 = vld [vmem:[#allocation10 + $0xc8] sm:$0xf]
    %v390 = vld [vmem:[#allocation10 + $0xcc] sm:$0xff]
    %v391 = vld [vmem:[#allocation10 + $0xd4] sm:$0xf]
    %v392 = vld [vmem:[#allocation10 + $0xd8] sm:$0xff]
    %v393 = vld [vmem:[#allocation10 + $0xe0] sm:$0xf]
    %v394 = vld [vmem:[#allocation10 + $0xe4] sm:$0xff]
    %v395 = vld [vmem:[#allocation10 + $0xec] sm:$0xf]
    %v396 = vld [vmem:[#allocation10 + $0xf0] sm:$0xff]
    %v397 = vld [vmem:[#allocation10 + $0xf8] sm:$0xf]
    %v398 = vld [vmem:[#allocation10 + $0xfc] sm:$0xff]
    %v399 = vld [vmem:[#allocation10 + $0x104] sm:$0xf]
    %v400 = vld [vmem:[#allocation10 + $0x108] sm:$0xff]
    %v401 = vld [vmem:[#allocation10 + $0x110] sm:$0xf]
    %v402 = vld [vmem:[#allocation10 + $0x114] sm:$0xff]
    %v403 = vld [vmem:[#allocation10 + $0x11c] sm:$0xf]
    %v404 = vld [vmem:[#allocation10 + $0x120] sm:$0xff]
    %v405 = vld [vmem:[#allocation10 + $0x128] sm:$0xf]
    %v406 = vld [vmem:[#allocation10 + $0x12c] sm:$0xff]
    %v407 = vld [vmem:[#allocation10 + $0x134] sm:$0xf]
    %v408 = vld [vmem:[#allocation10 + $0x138] sm:$0xff]
    %v409 = vld [vmem:[#allocation10 + $0x140] sm:$0xf]
    %v410 = vld [vmem:[#allocation10 + $0x144] sm:$0xff]
    %v411 = vld [vmem:[#allocation10 + $0x14c] sm:$0xf]
    %v412 = vld [vmem:[#allocation10 + $0x150] sm:$0xff]
    %v413 = vld [vmem:[#allocation10 + $0x158] sm:$0xf]
    %v414 = vld [vmem:[#allocation10 + $0x15c] sm:$0xff]
    %v415 = vld [vmem:[#allocation10 + $0x164] sm:$0xf]
    %v416 = vld [vmem:[#allocation10 + $0x168] sm:$0xff]
    %v417 = vld [vmem:[#allocation10 + $0x170] sm:$0xf]
    %v418 = vld [vmem:[#allocation10 + $0x174] sm:$0xff]
    %v419 = vld [vmem:[#allocation10 + $0x17c] sm:$0xf]
    %v420 = vld [vmem:[#allocation10 + $0x180] sm:$0xff]
    %v421 = vld [vmem:[#allocation10 + $0x188] sm:$0xf]
    %v422 = vld [vmem:[#allocation10 + $0x18c] sm:$0xff]
    %v423 = vld [vmem:[#allocation10 + $0x194] sm:$0xf]
    %v424 = vld [vmem:[#allocation10 + $0x198] sm:$0xff]
    %v425 = vld [vmem:[#allocation10 + $0x1a0] sm:$0xf]
    %v426 = vld [vmem:[#allocation10 + $0x1a4] sm:$0xff]
    %v427 = vld [vmem:[#allocation10 + $0x1ac] sm:$0xf]
    %v428 = vld [vmem:[#allocation10 + $0x1b0] sm:$0xff]
    %v429 = vld [vmem:[#allocation10 + $0x1b8] sm:$0xf]
    %v430 = vld [vmem:[#allocation10 + $0x1bc] sm:$0xff]
    %v431 = vld [vmem:[#allocation10 + $0x1c4] sm:$0xf]
    %v432 = vld [vmem:[#allocation10 + $0x1c8] sm:$0xff]
    %v433 = vld [vmem:[#allocation10 + $0x1d0] sm:$0xf]
    %v434 = vld [vmem:[#allocation10 + $0x1d4] sm:$0xff]
    %v435 = vld [vmem:[#allocation10 + $0x1dc] sm:$0xf]
    %v436 = vld [vmem:[#allocation10 + $0x1e0] sm:$0xff]
    %v437 = vld [vmem:[#allocation10 + $0x1e8] sm:$0xf]
    %v438 = vld [vmem:[#allocation10 + $0x1ec] sm:$0xff]
    %v439 = vld [vmem:[#allocation10 + $0x1f4] sm:$0xf]
    %v440 = vld [vmem:[#allocation10 + $0x1f8] sm:$0xff]
    %v441 = vld [vmem:[#allocation10 + $0x200] sm:$0xf]
    %v442 = vld [vmem:[#allocation10 + $0x204] sm:$0xff]
    %v443 = vld [vmem:[#allocation10 + $0x20c] sm:$0xf]
    %v444 = vld [vmem:[#allocation10 + $0x210] sm:$0xff]
    %v445 = vld [vmem:[#allocation10 + $0x218] sm:$0xf]
    %v446 = vld [vmem:[#allocation10 + $0x21c] sm:$0xff]
    %v447 = vld [vmem:[#allocation10 + $0x224] sm:$0xf]
    %v448 = vld [vmem:[#allocation10 + $0x228] sm:$0xff]
    %v449 = vld [vmem:[#allocation10 + $0x230] sm:$0xf]
    %v450 = vld [vmem:[#allocation10 + $0x234] sm:$0xff]
    %v451 = vld [vmem:[#allocation10 + $0x23c] sm:$0xf]
    %v452 = vld [vmem:[#allocation10 + $0x240] sm:$0xff]
    %v453 = vld [vmem:[#allocation10 + $0x248] sm:$0xf]
    %v454 = vld [vmem:[#allocation10 + $0x24c] sm:$0xff]
    %v455 = vld [vmem:[#allocation10 + $0x254] sm:$0xf]
    %v456 = vld [vmem:[#allocation10 + $0x258] sm:$0xff]
    %v457 = vld [vmem:[#allocation10 + $0x260] sm:$0xf]
    %v458 = vld [vmem:[#allocation10 + $0x264] sm:$0xff]
    %v459 = vld [vmem:[#allocation10 + $0x26c] sm:$0xf]
    %v460 = vld [vmem:[#allocation10 + $0x270] sm:$0xff]
    %v461 = vld [vmem:[#allocation10 + $0x278] sm:$0xf]
    %v462 = vld [vmem:[#allocation10 + $0x27c] sm:$0xff]
    %v463 = vld [vmem:[#allocation10 + $0x284] sm:$0xf]
    %v464 = vld [vmem:[#allocation10 + $0x288] sm:$0xff]
    %v465 = vld [vmem:[#allocation10 + $0x290] sm:$0xf]
    %v466 = vld [vmem:[#allocation10 + $0x294] sm:$0xff]
    %v467 = vld [vmem:[#allocation10 + $0x29c] sm:$0xf]
    %v468 = vld [vmem:[#allocation10 + $0x2a0] sm:$0xff]
    %v469 = vld [vmem:[#allocation10 + $0x2a8] sm:$0xf]
    %v470 = vld [vmem:[#allocation10 + $0x2ac] sm:$0xff]
    %v471 = vld [vmem:[#allocation10 + $0x2b4] sm:$0xf]
    %v472 = vld [vmem:[#allocation10 + $0x2b8] sm:$0xff]
    %v473 = vld [vmem:[#allocation10 + $0x2c0] sm:$0xf]
    %v474 = vld [vmem:[#allocation10 + $0x2c4] sm:$0xff]
    %v475 = vld [vmem:[#allocation10 + $0x2cc] sm:$0xf]
    %v476 = vld [vmem:[#allocation10 + $0x2d0] sm:$0xff]
    %v477 = vld [vmem:[#allocation10 + $0x2d8] sm:$0xf]
    %v478 = vld [vmem:[#allocation10 + $0x2dc] sm:$0xff]
    %v479 = vld [vmem:[#allocation10 + $0x2e4] sm:$0xf]
    %v480 = vld [vmem:[#allocation10 + $0x2e8] sm:$0xff]
    %v481 = vld [vmem:[#allocation10 + $0x2f0] sm:$0xf]
    %v482 = vld [vmem:[#allocation10 + $0x2f4] sm:$0xff]
    %v483 = vld [vmem:[#allocation10 + $0x2fc] sm:$0xf]
    %v484 = vld [vmem:[%s6] sm:$0x7]
    %v486 = vlaneseq
    %v487 = vshrl.u32 %v486, 7
    %v488 = vsub.s32 0, %v487
    %v489 = vrot.slane %v484, %v488
    %v490 = vlaneseq
    %v491 = vshrl.u32 %v490, 7
    %v492 = vsub.s32 1, %v491
    %v493 = vrot.slane %v484, %v492
    %v494 = vlaneseq
    %v495 = vshrl.u32 %v494, 7
    %v496 = vsub.s32 2, %v495
    %v497 = vrot.slane %v484, %v496
    %v629 = vunpack.c.l.b16 %v356
    %v630 = vunpack.c.h.b16 %v356
    %v631 = vunpack.c.l.b16 %v357
    %v632 = vunpack.c.l.b16 %v358
    %v633 = vunpack.c.h.b16 %v358
    %v634 = vunpack.c.l.b16 %v359
    %v635 = vunpack.c.l.b16 %v360
    %v636 = vunpack.c.h.b16 %v360
    %v637 = vunpack.c.l.b16 %v361
    %v638 = vunpack.c.l.b16 %v362
    %v639 = vunpack.c.h.b16 %v362
    %v640 = vunpack.c.l.b16 %v363
    %v641 = vunpack.c.l.b16 %v364
    %v642 = vunpack.c.h.b16 %v364
    %v643 = vunpack.c.l.b16 %v365
    %v644 = vunpack.c.l.b16 %v366
    %v645 = vunpack.c.h.b16 %v366
    %v646 = vunpack.c.l.b16 %v367
    %v647 = vunpack.c.l.b16 %v368
    %v648 = vunpack.c.h.b16 %v368
    %v649 = vunpack.c.l.b16 %v369
    %v650 = vunpack.c.l.b16 %v370
    %v651 = vunpack.c.h.b16 %v370
    %v652 = vunpack.c.l.b16 %v371
    %v653 = vunpack.c.l.b16 %v372
    %v654 = vunpack.c.h.b16 %v372
    %v655 = vunpack.c.l.b16 %v373
    %v656 = vunpack.c.l.b16 %v374
    %v657 = vunpack.c.h.b16 %v374
    %v658 = vunpack.c.l.b16 %v375
    %v659 = vunpack.c.l.b16 %v376
    %v660 = vunpack.c.h.b16 %v376
    %v661 = vunpack.c.l.b16 %v377
    %v662 = vunpack.c.l.b16 %v378
    %v663 = vunpack.c.h.b16 %v378
    %v664 = vunpack.c.l.b16 %v379
    %v665 = vunpack.c.l.b16 %v380
    %v666 = vunpack.c.h.b16 %v380
    %v667 = vunpack.c.l.b16 %v381
    %v668 = vunpack.c.l.b16 %v382
    %v669 = vunpack.c.h.b16 %v382
    %v670 = vunpack.c.l.b16 %v383
    %v671 = vunpack.c.l.b16 %v384
    %v672 = vunpack.c.h.b16 %v384
    %v673 = vunpack.c.l.b16 %v385
    %v674 = vunpack.c.l.b16 %v386
    %v675 = vunpack.c.h.b16 %v386
    %v676 = vunpack.c.l.b16 %v387
    %v677 = vunpack.c.l.b16 %v388
    %v678 = vunpack.c.h.b16 %v388
    %v679 = vunpack.c.l.b16 %v389
    %v680 = vunpack.c.l.b16 %v390
    %v681 = vunpack.c.h.b16 %v390
    %v682 = vunpack.c.l.b16 %v391
    %v683 = vunpack.c.l.b16 %v392
    %v684 = vunpack.c.h.b16 %v392
    %v685 = vunpack.c.l.b16 %v393
    %v686 = vunpack.c.l.b16 %v394
    %v687 = vunpack.c.h.b16 %v394
    %v688 = vunpack.c.l.b16 %v395
    %v689 = vunpack.c.l.b16 %v396
    %v690 = vunpack.c.h.b16 %v396
    %v691 = vunpack.c.l.b16 %v397
    %v692 = vunpack.c.l.b16 %v398
    %v693 = vunpack.c.h.b16 %v398
    %v694 = vunpack.c.l.b16 %v399
    %v695 = vunpack.c.l.b16 %v400
    %v696 = vunpack.c.h.b16 %v400
    %v697 = vunpack.c.l.b16 %v401
    %v698 = vunpack.c.l.b16 %v402
    %v699 = vunpack.c.h.b16 %v402
    %v700 = vunpack.c.l.b16 %v403
    %v701 = vunpack.c.l.b16 %v404
    %v702 = vunpack.c.h.b16 %v404
    %v703 = vunpack.c.l.b16 %v405
    %v704 = vunpack.c.l.b16 %v406
    %v705 = vunpack.c.h.b16 %v406
    %v706 = vunpack.c.l.b16 %v407
    %v707 = vunpack.c.l.b16 %v408
    %v708 = vunpack.c.h.b16 %v408
    %v709 = vunpack.c.l.b16 %v409
    %v710 = vunpack.c.l.b16 %v410
    %v711 = vunpack.c.h.b16 %v410
    %v712 = vunpack.c.l.b16 %v411
    %v713 = vunpack.c.l.b16 %v412
    %v714 = vunpack.c.h.b16 %v412
    %v715 = vunpack.c.l.b16 %v413
    %v716 = vunpack.c.l.b16 %v414
    %v717 = vunpack.c.h.b16 %v414
    %v718 = vunpack.c.l.b16 %v415
    %v719 = vunpack.c.l.b16 %v416
    %v720 = vunpack.c.h.b16 %v416
    %v721 = vunpack.c.l.b16 %v417
    %v722 = vunpack.c.l.b16 %v418
    %v723 = vunpack.c.h.b16 %v418
    %v724 = vunpack.c.l.b16 %v419
    %v725 = vunpack.c.l.b16 %v420
    %v726 = vunpack.c.h.b16 %v420
    %v727 = vunpack.c.l.b16 %v421
    %v728 = vunpack.c.l.b16 %v422
    %v729 = vunpack.c.h.b16 %v422
    %v730 = vunpack.c.l.b16 %v423
    %v731 = vunpack.c.l.b16 %v424
    %v732 = vunpack.c.h.b16 %v424
    %v733 = vunpack.c.l.b16 %v425
    %v734 = vunpack.c.l.b16 %v426
    %v735 = vunpack.c.h.b16 %v426
    %v736 = vunpack.c.l.b16 %v427
    %v737 = vunpack.c.l.b16 %v428
    %v738 = vunpack.c.h.b16 %v428
    %v739 = vunpack.c.l.b16 %v429
    %v740 = vunpack.c.l.b16 %v430
    %v741 = vunpack.c.h.b16 %v430
    %v742 = vunpack.c.l.b16 %v431
    %v743 = vunpack.c.l.b16 %v432
    %v744 = vunpack.c.h.b16 %v432
    %v745 = vunpack.c.l.b16 %v433
    %v746 = vunpack.c.l.b16 %v434
    %v747 = vunpack.c.h.b16 %v434
    %v748 = vunpack.c.l.b16 %v435
    %v749 = vunpack.c.l.b16 %v436
    %v750 = vunpack.c.h.b16 %v436
    %v751 = vunpack.c.l.b16 %v437
    %v752 = vunpack.c.l.b16 %v438
    %v753 = vunpack.c.h.b16 %v438
    %v754 = vunpack.c.l.b16 %v439
    %v755 = vunpack.c.l.b16 %v440
    %v756 = vunpack.c.h.b16 %v440
    %v757 = vunpack.c.l.b16 %v441
    %v758 = vunpack.c.l.b16 %v442
    %v759 = vunpack.c.h.b16 %v442
    %v760 = vunpack.c.l.b16 %v443
    %v761 = vunpack.c.l.b16 %v444
    %v762 = vunpack.c.h.b16 %v444
    %v763 = vunpack.c.l.b16 %v445
    %v764 = vunpack.c.l.b16 %v446
    %v765 = vunpack.c.h.b16 %v446
    %v766 = vunpack.c.l.b16 %v447
    %v767 = vunpack.c.l.b16 %v448
    %v768 = vunpack.c.h.b16 %v448
    %v769 = vunpack.c.l.b16 %v449
    %v770 = vunpack.c.l.b16 %v450
    %v771 = vunpack.c.h.b16 %v450
    %v772 = vunpack.c.l.b16 %v451
    %v773 = vunpack.c.l.b16 %v452
    %v774 = vunpack.c.h.b16 %v452
    %v775 = vunpack.c.l.b16 %v453
    %v776 = vunpack.c.l.b16 %v454
    %v777 = vunpack.c.h.b16 %v454
    %v778 = vunpack.c.l.b16 %v455
    %v779 = vunpack.c.l.b16 %v456
    %v780 = vunpack.c.h.b16 %v456
    %v781 = vunpack.c.l.b16 %v457
    %v782 = vunpack.c.l.b16 %v458
    %v783 = vunpack.c.h.b16 %v458
    %v784 = vunpack.c.l.b16 %v459
    %v785 = vunpack.c.l.b16 %v460
    %v786 = vunpack.c.h.b16 %v460
    %v787 = vunpack.c.l.b16 %v461
    %v788 = vunpack.c.l.b16 %v462
    %v789 = vunpack.c.h.b16 %v462
    %v790 = vunpack.c.l.b16 %v463
    %v791 = vunpack.c.l.b16 %v464
    %v792 = vunpack.c.h.b16 %v464
    %v793 = vunpack.c.l.b16 %v465
    %v794 = vunpack.c.l.b16 %v466
    %v795 = vunpack.c.h.b16 %v466
    %v796 = vunpack.c.l.b16 %v467
    %v797 = vunpack.c.l.b16 %v468
    %v798 = vunpack.c.h.b16 %v468
    %v799 = vunpack.c.l.b16 %v469
    %v800 = vunpack.c.l.b16 %v470
    %v801 = vunpack.c.h.b16 %v470
    %v802 = vunpack.c.l.b16 %v471
    %v803 = vunpack.c.l.b16 %v472
    %v804 = vunpack.c.h.b16 %v472
    %v805 = vunpack.c.l.b16 %v473
    %v806 = vunpack.c.l.b16 %v474
    %v807 = vunpack.c.h.b16 %v474
    %v808 = vunpack.c.l.b16 %v475
    %v809 = vunpack.c.l.b16 %v476
    %v810 = vunpack.c.h.b16 %v476
    %v811 = vunpack.c.l.b16 %v477
    %v812 = vunpack.c.l.b16 %v478
    %v813 = vunpack.c.h.b16 %v478
    %v814 = vunpack.c.l.b16 %v479
    %v815 = vunpack.c.l.b16 %v480
    %v816 = vunpack.c.h.b16 %v480
    %v817 = vunpack.c.l.b16 %v481
    %v818 = vunpack.c.l.b16 %v482
    %v819 = vunpack.c.h.b16 %v482
    %v820 = vunpack.c.l.b16 %v483
    %v821 = vpack.c.b16 %v632, %v629
    %v822 = vpack.c.b16 %v633, %v630
    %v823 = vpack.c.b16 %v634, %v631
    %v824 = vpack.c.b16 %v638, %v635
    %v825 = vpack.c.b16 %v639, %v636
    %v826 = vpack.c.b16 %v640, %v637
    %v827 = vpack.c.b16 %v644, %v641
    %v828 = vpack.c.b16 %v645, %v642
    %v829 = vpack.c.b16 %v646, %v643
    %v830 = vpack.c.b16 %v650, %v647
    %v831 = vpack.c.b16 %v651, %v648
    %v832 = vpack.c.b16 %v652, %v649
    %v833 = vpack.c.b16 %v656, %v653
    %v834 = vpack.c.b16 %v657, %v654
    %v835 = vpack.c.b16 %v658, %v655
    %v836 = vpack.c.b16 %v662, %v659
    %v837 = vpack.c.b16 %v663, %v660
    %v838 = vpack.c.b16 %v664, %v661
    %v839 = vpack.c.b16 %v668, %v665
    %v840 = vpack.c.b16 %v669, %v666
    %v841 = vpack.c.b16 %v670, %v667
    %v842 = vpack.c.b16 %v674, %v671
    %v843 = vpack.c.b16 %v675, %v672
    %v844 = vpack.c.b16 %v676, %v673
    %v845 = vpack.c.b16 %v680, %v677
    %v846 = vpack.c.b16 %v681, %v678
    %v847 = vpack.c.b16 %v682, %v679
    %v848 = vpack.c.b16 %v686, %v683
    %v849 = vpack.c.b16 %v687, %v684
    %v850 = vpack.c.b16 %v688, %v685
    %v851 = vpack.c.b16 %v692, %v689
    %v852 = vpack.c.b16 %v693, %v690
    %v853 = vpack.c.b16 %v694, %v691
    %v854 = vpack.c.b16 %v698, %v695
    %v855 = vpack.c.b16 %v699, %v696
    %v856 = vpack.c.b16 %v700, %v697
    %v857 = vpack.c.b16 %v704, %v701
    %v858 = vpack.c.b16 %v705, %v702
    %v859 = vpack.c.b16 %v706, %v703
    %v860 = vpack.c.b16 %v710, %v707
    %v861 = vpack.c.b16 %v711, %v708
    %v862 = vpack.c.b16 %v712, %v709
    %v863 = vpack.c.b16 %v716, %v713
    %v864 = vpack.c.b16 %v717, %v714
    %v865 = vpack.c.b16 %v718, %v715
    %v866 = vpack.c.b16 %v722, %v719
    %v867 = vpack.c.b16 %v723, %v720
    %v868 = vpack.c.b16 %v724, %v721
    %v869 = vpack.c.b16 %v728, %v725
    %v870 = vpack.c.b16 %v729, %v726
    %v871 = vpack.c.b16 %v730, %v727
    %v872 = vpack.c.b16 %v734, %v731
    %v873 = vpack.c.b16 %v735, %v732
    %v874 = vpack.c.b16 %v736, %v733
    %v875 = vpack.c.b16 %v740, %v737
    %v876 = vpack.c.b16 %v741, %v738
    %v877 = vpack.c.b16 %v742, %v739
    %v878 = vpack.c.b16 %v746, %v743
    %v879 = vpack.c.b16 %v747, %v744
    %v880 = vpack.c.b16 %v748, %v745
    %v881 = vpack.c.b16 %v752, %v749
    %v882 = vpack.c.b16 %v753, %v750
    %v883 = vpack.c.b16 %v754, %v751
    %v884 = vpack.c.b16 %v758, %v755
    %v885 = vpack.c.b16 %v759, %v756
    %v886 = vpack.c.b16 %v760, %v757
    %v887 = vpack.c.b16 %v764, %v761
    %v888 = vpack.c.b16 %v765, %v762
    %v889 = vpack.c.b16 %v766, %v763
    %v890 = vpack.c.b16 %v770, %v767
    %v891 = vpack.c.b16 %v771, %v768
    %v892 = vpack.c.b16 %v772, %v769
    %v893 = vpack.c.b16 %v776, %v773
    %v894 = vpack.c.b16 %v777, %v774
    %v895 = vpack.c.b16 %v778, %v775
    %v896 = vpack.c.b16 %v782, %v779
    %v897 = vpack.c.b16 %v783, %v780
    %v898 = vpack.c.b16 %v784, %v781
    %v899 = vpack.c.b16 %v788, %v785
    %v900 = vpack.c.b16 %v789, %v786
    %v901 = vpack.c.b16 %v790, %v787
    %v902 = vpack.c.b16 %v794, %v791
    %v903 = vpack.c.b16 %v795, %v792
    %v904 = vpack.c.b16 %v796, %v793
    %v905 = vpack.c.b16 %v800, %v797
    %v906 = vpack.c.b16 %v801, %v798
    %v907 = vpack.c.b16 %v802, %v799
    %v908 = vpack.c.b16 %v806, %v803
    %v909 = vpack.c.b16 %v807, %v804
    %v910 = vpack.c.b16 %v808, %v805
    %v911 = vpack.c.b16 %v812, %v809
    %v912 = vpack.c.b16 %v813, %v810
    %v913 = vpack.c.b16 %v814, %v811
    %v914 = vpack.c.b16 %v818, %v815
    %v915 = vpack.c.b16 %v819, %v816
    %v916 = vpack.c.b16 %v820, %v817
    %1013 = vmatprep.subr.bf16.mxu0 %v843
    %1014 = vmatpush1.bf16.msra.mxu0 %v842
    %1015 = vmatprep.subr.bf16.mxu0 %v840
    %1016 = vmatpush1.bf16.msra.mxu0 %v839
    %1017 = vmatprep.subr.bf16.mxu0 %v837
    %1018 = vmatpush1.bf16.msra.mxu0 %v836
    %1019 = vmatprep.subr.bf16.mxu0 %v834
    %1020 = vmatpush1.bf16.msra.mxu0 %v833
    %1021 = vmatprep.subr.bf16.mxu0 %v831
    %1022 = vmatpush1.bf16.msra.mxu0 %v830
    %1023 = vmatprep.subr.bf16.mxu0 %v828
    %1024 = vmatpush1.bf16.msra.mxu0 %v827
    %1025 = vmatprep.subr.bf16.mxu0 %v825
    %1026 = vmatpush1.bf16.msra.mxu0 %v824
    %1027 = vmatprep.subr.bf16.mxu0 %v822
    %1028 = vmatpush1.bf16.msra.mxu0 %v821
    %1029 = vmatprep.subr.bf16.mxu0 %v867
    %1030 = vmatpush2.bf16.msra.mxu0 %v866
    %1031 = vmatprep.subr.bf16.mxu0 %v864
    %1032 = vmatpush2.bf16.msra.mxu0 %v863
    %1033 = vmatprep.subr.bf16.mxu0 %v861
    %1034 = vmatpush2.bf16.msra.mxu0 %v860
    %1035 = vmatprep.subr.bf16.mxu0 %v858
    %1036 = vmatpush2.bf16.msra.mxu0 %v857
    %1037 = vmatprep.subr.bf16.mxu0 %v855
    %1038 = vmatpush2.bf16.msra.mxu0 %v854
    %1039 = vmatprep.subr.bf16.mxu0 %v852
    %1040 = vmatpush2.bf16.msra.mxu0 %v851
    %1041 = vmatprep.subr.bf16.mxu0 %v849
    %1042 = vmatpush2.bf16.msra.mxu0 %v848
    %1043 = vmatprep.subr.bf16.mxu0 %v846
    %1044 = vmatpush2.bf16.msra.mxu0 %v845
    %1045 = vmatprep.mubr.bf16.mxu0 %v353
    %1046 = vmatmul.mubr.bf16.gmra.mxu0 %v352
    %v1047 = vpop.f32.mrf.mxu0
    %v1048 = vadd.f32 %v489, %v1047
    %v1049 = vpop.f32.mrf.mxu0
    %v1050 = vadd.f32 %v493, %v1049
    %v1051 = vpop.f32.mrf.mxu0
    %v1052 = vpop.f32.mrf.mxu0
    %1053 = vdwg.mxu0
    %1054 = vmatprep.subr.bf16.mxu0 %v891
    %1055 = vmatpush1.bf16.msra.mxu0 %v890
    %1056 = vmatprep.subr.bf16.mxu0 %v888
    %1057 = vmatpush1.bf16.msra.mxu0 %v887
    %1058 = vmatprep.subr.bf16.mxu0 %v885
    %1059 = vmatpush1.bf16.msra.mxu0 %v884
    %1060 = vmatprep.subr.bf16.mxu0 %v882
    %1061 = vmatpush1.bf16.msra.mxu0 %v881
    %1062 = vmatprep.subr.bf16.mxu0 %v879
    %1063 = vmatpush1.bf16.msra.mxu0 %v878
    %1064 = vmatprep.subr.bf16.mxu0 %v876
    %1065 = vmatpush1.bf16.msra.mxu0 %v875
    %1066 = vmatprep.subr.bf16.mxu0 %v873
    %1067 = vmatpush1.bf16.msra.mxu0 %v872
    %1068 = vmatprep.subr.bf16.mxu0 %v870
    %1069 = vmatpush1.bf16.msra.mxu0 %v869
    %1070 = vmatprep.subr.bf16.mxu0 %v915
    %1071 = vmatpush2.bf16.msra.mxu0 %v914
    %1072 = vmatprep.subr.bf16.mxu0 %v912
    %1073 = vmatpush2.bf16.msra.mxu0 %v911
    %1074 = vmatprep.subr.bf16.mxu0 %v909
    %1075 = vmatpush2.bf16.msra.mxu0 %v908
    %1076 = vmatprep.subr.bf16.mxu0 %v906
    %1077 = vmatpush2.bf16.msra.mxu0 %v905
    %1078 = vmatprep.subr.bf16.mxu0 %v903
    %1079 = vmatpush2.bf16.msra.mxu0 %v902
    %1080 = vmatprep.subr.bf16.mxu0 %v900
    %1081 = vmatpush2.bf16.msra.mxu0 %v899
    %1082 = vmatprep.subr.bf16.mxu0 %v897
    %1083 = vmatpush2.bf16.msra.mxu0 %v896
    %1084 = vmatprep.subr.bf16.mxu0 %v894
    %1085 = vmatpush2.bf16.msra.mxu0 %v893
    %1086 = vmatprep.mubr.bf16.mxu0 %v355
    %1087 = vmatmul.mubr.bf16.gmra.mxu0 %v354
    %v1088 = vpop.f32.mrf.mxu0
    %v1089 = vadd.f32 %v1048, %v1088
    %v1090 = vpop.f32.mrf.mxu0
    %v1091 = vadd.f32 %v1050, %v1090
    %v1092 = vpop.f32.mrf.mxu0
    %v1093 = vpop.f32.mrf.mxu0
    %1094 = vdwg.mxu0
    %1095 = vmatprep.subr.bf16.mxu0 0
    %1096 = vmatpush1.bf16.msra.mxu0 %v844
    %1097 = vmatprep.subr.bf16.mxu0 0
    %1098 = vmatpush1.bf16.msra.mxu0 %v841
    %1099 = vmatprep.subr.bf16.mxu0 0
    %1100 = vmatpush1.bf16.msra.mxu0 %v838
    %1101 = vmatprep.subr.bf16.mxu0 0
    %1102 = vmatpush1.bf16.msra.mxu0 %v835
    %1103 = vmatprep.subr.bf16.mxu0 0
    %1104 = vmatpush1.bf16.msra.mxu0 %v832
    %1105 = vmatprep.subr.bf16.mxu0 0
    %1106 = vmatpush1.bf16.msra.mxu0 %v829
    %1107 = vmatprep.subr.bf16.mxu0 0
    %1108 = vmatpush1.bf16.msra.mxu0 %v826
    %1109 = vmatprep.subr.bf16.mxu0 0
    %1110 = vmatpush1.bf16.msra.mxu0 %v823
    %1111 = vmatprep.subr.bf16.mxu0 0
    %1112 = vmatpush2.bf16.msra.mxu0 %v868
    %1113 = vmatprep.subr.bf16.mxu0 0
    %1114 = vmatpush2.bf16.msra.mxu0 %v865
    %1115 = vmatprep.subr.bf16.mxu0 0
    %1116 = vmatpush2.bf16.msra.mxu0 %v862
    %1117 = vmatprep.subr.bf16.mxu0 0
    %1118 = vmatpush2.bf16.msra.mxu0 %v859
    %1119 = vmatprep.subr.bf16.mxu0 0
    %1120 = vmatpush2.bf16.msra.mxu0 %v856
    %1121 = vmatprep.subr.bf16.mxu0 0
    %1122 = vmatpush2.bf16.msra.mxu0 %v853
    %1123 = vmatprep.subr.bf16.mxu0 0
    %1124 = vmatpush2.bf16.msra.mxu0 %v850
    %1125 = vmatprep.subr.bf16.mxu0 0
    %1126 = vmatpush2.bf16.msra.mxu0 %v847
    %1127 = vmatprep.mubr.bf16.mxu0 %v353
    %1128 = vmatmul.mubr.bf16.gmra.mxu0 %v352
    %v1129 = vpop.f32.mrf.mxu0
    %v1130 = vadd.f32 %v497, %v1129
    %v1131 = vpop.f32.mrf.mxu0
    %v1132 = vpop.f32.mrf.mxu0
    %v1133 = vpop.f32.mrf.mxu0
    %1134 = vdwg.mxu0
    %1135 = vmatprep.subr.bf16.mxu0 0
    %1136 = vmatpush1.bf16.msra.mxu0 %v892
    %1137 = vmatprep.subr.bf16.mxu0 0
    %1138 = vmatpush1.bf16.msra.mxu0 %v889
    %1139 = vmatprep.subr.bf16.mxu0 0
    %1140 = vmatpush1.bf16.msra.mxu0 %v886
    %1141 = vmatprep.subr.bf16.mxu0 0
    %1142 = vmatpush1.bf16.msra.mxu0 %v883
    %1143 = vmatprep.subr.bf16.mxu0 0
    %1144 = vmatpush1.bf16.msra.mxu0 %v880
    %1145 = vmatprep.subr.bf16.mxu0 0
    %1146 = vmatpush1.bf16.msra.mxu0 %v877
    %1147 = vmatprep.subr.bf16.mxu0 0
    %1148 = vmatpush1.bf16.msra.mxu0 %v874
    %1149 = vmatprep.subr.bf16.mxu0 0
    %1150 = vmatpush1.bf16.msra.mxu0 %v871
    %1151 = vmatprep.subr.bf16.mxu0 0
    %1152 = vmatpush2.bf16.msra.mxu0 %v916
    %1153 = vmatprep.subr.bf16.mxu0 0
    %1154 = vmatpush2.bf16.msra.mxu0 %v913
    %1155 = vmatprep.subr.bf16.mxu0 0
    %1156 = vmatpush2.bf16.msra.mxu0 %v910
    %1157 = vmatprep.subr.bf16.mxu0 0
    %1158 = vmatpush2.bf16.msra.mxu0 %v907
    %1159 = vmatprep.subr.bf16.mxu0 0
    %1160 = vmatpush2.bf16.msra.mxu0 %v904
    %1161 = vmatprep.subr.bf16.mxu0 0
    %1162 = vmatpush2.bf16.msra.mxu0 %v901
    %1163 = vmatprep.subr.bf16.mxu0 0
    %1164 = vmatpush2.bf16.msra.mxu0 %v898
    %1165 = vmatprep.subr.bf16.mxu0 0
    %1166 = vmatpush2.bf16.msra.mxu0 %v895
    %1167 = vmatprep.mubr.bf16.mxu0 %v355
    %1168 = vmatmul.mubr.bf16.gmra.mxu0 %v354
    %v1169 = vpop.f32.mrf.mxu0
    %v1170 = vadd.f32 %v1130, %v1169
    %v1171 = vpop.f32.mrf.mxu0
    %v1172 = vpop.f32.mrf.mxu0
    %v1173 = vpop.f32.mrf.mxu0
    %1174 = vdwg.mxu0
    %v1175 = vmax.f32 %v1089, 0.0
    %v1176 = vmax.f32 %v1091, 0.0
    %v1177 = vmax.f32 %v1170, 0.0
    %v1178 = vld [vmem:[%s7] sm:$0x7]
    %v1180 = vlaneseq
    %v1181 = vshrl.u32 %v1180, 7
    %v1182 = vsub.s32 0, %v1181
    %v1183 = vrot.slane %v1178, %v1182
    %v1184 = vlaneseq
    %v1185 = vshrl.u32 %v1184, 7
    %v1186 = vsub.s32 1, %v1185
    %v1187 = vrot.slane %v1178, %v1186
    %v1188 = vlaneseq
    %v1189 = vshrl.u32 %v1188, 7
    %v1190 = vsub.s32 2, %v1189
    %v1191 = vrot.slane %v1178, %v1190
    %v1195 = vmul.f32 %v1175, %v1183
    %v1196 = vmul.f32 %v1176, %v1187
    %v1197 = vmul.f32 %v1177, %v1191
    %vm1198 = vcmask 1041408
    %v1199 = vsel %vm1198, %v1195, 0.0
    %v1200 = vsel %vm1198, %v1196, 0.0
    %v1201 = vadd.f32 %v1199, %v1200
    %v1202 = vsel %vm1198, %v1197, 0.0
    %v1203 = vadd.f32 %v1201, %v1202
    %1204 = vadd.xlane.f32.xlu0 %v1203
    %v1205 = vpop.xlane.xlu0 %1204
    %v1206 = vld [vmem:[#allocation2] sm:$0x1]
    %v1208 = vlaneseq
    %v1209 = vshrl.u32 %v1208, 7
    %v1210 = vsub.s32 0, %v1209
    %v1211 = vrot.slane %v1206, %v1210
    %v1213 = vadd.f32 %v1205, %v1211
    %vm1214 = vcmask 1024
    %1215 = vst.msk [vmem:[%s9] sm:$0x3] %vm1214, %v1213
    // Predicated region
    $region58: #{tpu_custom_call.1} parent=1 // pred_check
      _
    $region59: #{tpu_custom_call.1} parent=1 // pred_check_branch
      %1217 = sbr.rel (0) target = $region61
    $region60: #{tpu_custom_call.1} parent=1 // pred_region
      _
    $region61: #{tpu_custom_call.1} parent=1 // pred_fallthru
      _
    // Predicated region
    $region62: #{tpu_custom_call.1} parent=1 // pred_check
      _
    $region63: #{tpu_custom_call.1} parent=1 // pred_check_branch
      %1219 = sbr.rel (0) target = $region65
    $region64: #{tpu_custom_call.1} parent=1 // pred_region
      _
    $region65: #{tpu_custom_call.1} parent=1 // pred_fallthru
      _
    %1220 = vsyncpa [#allocation4], 1
    %1221 = vsyncpa [#allocation6], 1
    %1222 = vsyncpa [#allocation9], 1

</llo_original>
